<compile_context>
chip_gen: v5e
topology: v5e:2x2
jax: 0.10.0
libtpu: 0.0.40
codegen_flags: <defaults>
</compile_context>

<pallas_src>
import functools

import jax
import jax.numpy as jnp
from jax import lax
from jax.experimental import pallas as pl
from jax.experimental.pallas import tpu as pltpu


# -----------------------------------------------------------------------------
# Parameter preprocessing (hoisted out of the forward path; call ONCE).
# -----------------------------------------------------------------------------
def prepare_conv_lstm_params(conv_weight, conv_bias, input_dim, hidden_dim,
                             matmul_dtype=jnp.bfloat16):
    """conv_weight: (4H, input_dim + hidden_dim, K), conv_bias: (4H,).

    Returns (wx, wh, bias2d):
      wx     : (input_dim, 4H)  matmul_dtype  (center tap, x-channel rows, transposed)
      wh     : (hidden_dim, 4H) matmul_dtype  (center tap, h-channel rows, transposed)
      bias2d : (1, 4H)          float32
    """
    out_ch, in_ch, K = conv_weight.shape
    # Center-tap reduction is only valid for odd K with padding=K//2 and
    # spatial length 1 (for even K two taps would touch real data).
    assert K % 2 == 1, "ConvLSTMCell Pallas kernel requires odd kernel_size"
    assert out_ch == 4 * hidden_dim and in_ch == input_dim + hidden_dim

    center = conv_weight[:, :, K // 2]                              # (4H, Cin)
    wx = jnp.asarray(center[:, :input_dim].T, dtype=matmul_dtype)   # (Din, 4H)
    wh = jnp.asarray(center[:, input_dim:].T, dtype=matmul_dtype)   # (H, 4H)
    bias2d = jnp.asarray(conv_bias, dtype=jnp.float32).reshape(1, 4 * hidden_dim)
    return wx, wh, bias2d


# -----------------------------------------------------------------------------
# Shared gate math (f32; one sigmoid over contiguous i|f|o lanes, one tanh).
# -----------------------------------------------------------------------------
def _lstm_gates(gates, c_cur, hidden_dim):
    H = hidden_dim
    ifo = jax.nn.sigmoid(gates[:, :3 * H])
    g = jnp.tanh(gates[:, 3 * H:])
    c_next = ifo[:, H:2 * H] * c_cur + ifo[:, :H] * g
    h_next = ifo[:, 2 * H:3 * H] * jnp.tanh(c_next)
    return h_next, c_next


# -----------------------------------------------------------------------------
# Single-step kernel (one direct module forward; both matmuls in-kernel).
# -----------------------------------------------------------------------------
def _convlstm_step_kernel(x_ref, h_ref, c_ref, wx_ref, wh_ref, b_ref,
                          hc_out_ref, *, hidden_dim):
    cd = wx_ref.dtype                                       # MXU operand dtype
    gates = jnp.dot(x_ref[...].astype(cd), wx_ref[...],
                    preferred_element_type=jnp.float32)
    gates = gates + jnp.dot(h_ref[...].astype(cd), wh_ref[...],
                            preferred_element_type=jnp.float32)
    gates = gates + b_ref[...]                              # (B, 4H) f32

    h_next, c_next = _lstm_gates(gates, c_ref[...], hidden_dim)

    # Single lane-dense (B, 2H) store: h in lanes [0,H), c in [H,2H).
    hc_out_ref[...] = jnp.concatenate([h_next, c_next], axis=1).astype(
        hc_out_ref.dtype)


def conv_lstm_cell_forward(input_tensor, h_cur, c_cur, params):
    """Pallas ConvLSTMCell.forward (single step).

    Args:
      input_tensor: (B, input_dim) float32
      h_cur, c_cur: (B, hidden_dim, 1) float32  (PyTorch layout)
      params: output of prepare_conv_lstm_params
    Returns:
      (h_next, c_next), each (B, hidden_dim, 1) float32
    """
    wx, wh, bias2d = params
    B, _ = input_tensor.shape
    H = wh.shape[0]

    kernel = functools.partial(_convlstm_step_kernel, hidden_dim=H)
    vmem = pl.BlockSpec(memory_space=pltpu.MemorySpace.VMEM)

    hc = pl.pallas_call(
        kernel,
        out_shape=jax.ShapeDtypeStruct((B, 2 * H), jnp.float32),
        in_specs=[vmem] * 6,
        out_specs=vmem,
    )(input_tensor, h_cur[:, :, 0], c_cur[:, :, 0], wx, wh, bias2d)

    h_next = hc[:, :H][:, :, None]
    c_next = hc[:, H:][:, :, None]
    return h_next, c_next


# -----------------------------------------------------------------------------
# Fused multi-step kernel: x-projection hoisted out, time axis blocked,
# weights / h0 / c0 VMEM-resident, h/c carried in VMEM scratch across blocks.
# -----------------------------------------------------------------------------
def _convlstm_seq_kernel(gx_ref, wh_ref, h0_ref, c0_ref, hc_out_ref,
                         h_scr, c_scr, *, hidden_dim, time_block):
    H = hidden_dim
    tb = pl.program_id(0)

    @pl.when(tb == 0)
    def _():
        h_scr[...] = h0_ref[...]
        c_scr[...] = c0_ref[...]

    wh = wh_ref[...]                       # hoisted out of the inner time loop
    cd = wh.dtype

    def step(s, carry):
        h, c = carry
        # gx already holds x@Wx + b (f32); only the small h@Wh stays serial.
        gates = gx_ref[s] + jnp.dot(h.astype(cd), wh,
                                    preferred_element_type=jnp.float32)
        h_next, c_next = _lstm_gates(gates, c, H)
        hc_out_ref[s] = jnp.concatenate([h_next, c_next], axis=1).astype(
            hc_out_ref.dtype)
        return (h_next, c_next)

    # Unrolled so the LLO scheduler can overlap step-(t+1) MXU work with
    # step-t sigmoid/tanh EUP work (only true dependency is through h/c).
    h, c = lax.fori_loop(0, time_block, step, (h_scr[...], c_scr[...]),
                         unroll=True)
    h_scr[...] = h
    c_scr[...] = c


def conv_lstm_cell_multi_step(x_seq, h_cur, c_cur, params, time_block=8):
    """Run T recurrent cell steps in one pallas_call (blocked time grid axis).

    Args:
      x_seq: (T, B, input_dim) float32
      h_cur, c_cur: (B, hidden_dim, 1) float32
    Returns:
      h_seq (T, B, hidden_dim), (h_last, c_last) each (B, hidden_dim, 1)
    """
    wx, wh, bias2d = params
    T, B, Din = x_seq.shape
    H = wh.shape[0]

    # Hoisted input projection: one big MXU-friendly matmul (M = T*B) in XLA,
    # ~77% of the matmul FLOPs removed from the serial recurrence.
    gx = jnp.dot(x_seq.reshape(T * B, Din).astype(wx.dtype), wx,
                 preferred_element_type=jnp.float32)
    gx = (gx + bias2d).reshape(T, B, 4 * H)

    tt = min(time_block, T)
    num_tb = pl.cdiv(T, tt)   # trailing partial block computes throwaway steps;
                              # their OOB output writes are dropped.

    kernel = functools.partial(_convlstm_seq_kernel, hidden_dim=H,
                               time_block=tt)

    hc_seq = pl.pallas_call(
        kernel,
        out_shape=jax.ShapeDtypeStruct((T, B, 2 * H), jnp.float32),
        grid_spec=pltpu.PrefetchScalarGridSpec(
            num_scalar_prefetch=0,
            grid=(num_tb,),
            in_specs=[
                # Per-time-block gx tile.
                pl.BlockSpec((tt, B, 4 * H), lambda tb: (tb, 0, 0)),
                # Constant block index => DMA'd once, stay resident in VMEM.
                pl.BlockSpec((H, 4 * H), lambda tb: (0, 0)),
                pl.BlockSpec((B, H), lambda tb: (0, 0)),
                pl.BlockSpec((B, H), lambda tb: (0, 0)),
            ],
            out_specs=pl.BlockSpec((tt, B, 2 * H), lambda tb: (tb, 0, 0)),
            scratch_shapes=[
                pltpu.VMEM((B, H), jnp.float32),   # h carry across time blocks
                pltpu.VMEM((B, H), jnp.float32),   # c carry across time blocks
            ],
        ),
        # The time-block axis is a true recurrence -> sequential.
        compiler_params=pltpu.CompilerParams(
            dimension_semantics=("arbitrary",)),
    )(gx, wh, h_cur[:, :, 0], c_cur[:, :, 0])

    h_seq = hc_seq[:, :, :H]
    h_last = hc_seq[T - 1, :, :H][:, :, None]
    c_last = hc_seq[T - 1, :, H:][:, :, None]
    return h_seq, (h_last, c_last)


# -----------------------------------------------------------------------------
# Pure-JAX references for verification.
# -----------------------------------------------------------------------------
def _reference_step(x2d, h2d, c2d, wx, wh, bias2d):
    """Mirrors the kernel math (same weight dtype / f32 accumulation)."""
    cd = wx.dtype
    H = wh.shape[0]
    gates = (jnp.dot(x2d.astype(cd), wx, preferred_element_type=jnp.float32)
             + jnp.dot(h2d.astype(cd), wh, preferred_element_type=jnp.float32)
             + bias2d)
    i = jax.nn.sigmoid(gates[:, 0 * H:1 * H])
    f = jax.nn.sigmoid(gates[:, 1 * H:2 * H])
    o = jax.nn.sigmoid(gates[:, 2 * H:3 * H])
    g = jnp.tanh(gates[:, 3 * H:4 * H])
    c_next = f * c2d + i * g
    h_next = o * jnp.tanh(c_next)
    return h_next, c_next


def _reference_forward_pytorch(input_tensor, h_cur, c_cur, conv_weight, conv_bias):
    """Full-f32 mirror of the PyTorch forward (center tap, length-1 input)."""
    K = conv_weight.shape[2]
    combined = jnp.concatenate([input_tensor[:, :, None], h_cur], axis=1)
    out = jnp.einsum('bc,oc->bo', combined[:, :, 0], conv_weight[:, :, K // 2])
    out = out + conv_bias[None, :]
    cc_i, cc_f, cc_o, cc_g = jnp.split(out, 4, axis=1)
    i = jax.nn.sigmoid(cc_i)
    f = jax.nn.sigmoid(cc_f)
    o = jax.nn.sigmoid(cc_o)
    g = jnp.tanh(cc_g)
    c_next = f * c_cur[:, :, 0] + i * g
    h_next = o * jnp.tanh(c_next)
    return h_next[:, :, None], c_next[:, :, None]


if __name__ == "__main__":
    # Shapes from the module defaults (first layer): input_dim=220,
    # hidden_dim=64, kernel_size=3, bias=True. Small batch / short sequence.
    B = 2
    INPUT_DIM = 220
    HIDDEN_DIM = 64
    K = 3
    T = 6

    key = jax.random.PRNGKey(0)
    k_x, k_seq, k_h, k_c, k_w, k_b = jax.random.split(key, 6)

    x = jax.random.normal(k_x, (B, INPUT_DIM), dtype=jnp.float32)
    x_seq = jax.random.normal(k_seq, (T, B, INPUT_DIM), dtype=jnp.float32)
    h0 = jax.random.normal(k_h, (B, HIDDEN_DIM, 1), dtype=jnp.float32)
    c0 = jax.random.normal(k_c, (B, HIDDEN_DIM, 1), dtype=jnp.float32)

    cin = INPUT_DIM + HIDDEN_DIM
    conv_weight = 0.05 * jax.random.normal(
        k_w, (4 * HIDDEN_DIM, cin, K), dtype=jnp.float32)
    conv_bias = 0.05 * jax.random.normal(
        k_b, (4 * HIDDEN_DIM,), dtype=jnp.float32)

    # Hoisted parameter prep — done ONCE, not per forward call.
    params = prepare_conv_lstm_params(conv_weight, conv_bias, INPUT_DIM, HIDDEN_DIM)

    # ---- single cell step (direct module forward) ----
    h1, c1 = conv_lstm_cell_forward(x, h0, c0, params)
    jax.block_until_ready((h1, c1))
    assert h1.shape == (B, HIDDEN_DIM, 1) and c1.shape == (B, HIDDEN_DIM, 1)

    h_ref, c_ref = _reference_step(x, h0[:, :, 0], c0[:, :, 0], *params)
    assert jnp.allclose(h1[:, :, 0], h_ref, atol=2e-3, rtol=2e-3)
    assert jnp.allclose(c1[:, :, 0], c_ref, atol=2e-3, rtol=2e-3)

    # Looser check vs. the full-f32 PyTorch-semantics reference (bf16 weights).
    h_fp, c_fp = _reference_forward_pytorch(x, h0, c0, conv_weight, conv_bias)
    assert jnp.allclose(h1, h_fp, atol=2e-2, rtol=2e-2)
    assert jnp.allclose(c1, c_fp, atol=2e-2, rtol=2e-2)

    # ---- fused multi-step (hoisted x-projection, blocked time axis) ----
    h_seq, (hT, cT) = conv_lstm_cell_multi_step(x_seq, h0, c0, params)
    jax.block_until_ready((h_seq, hT, cT))
    assert h_seq.shape == (T, B, HIDDEN_DIM)

    h_r, c_r = h0[:, :, 0], c0[:, :, 0]
    for t in range(T):
        h_r, c_r = _reference_step(x_seq[t], h_r, c_r, *params)
        assert jnp.allclose(h_seq[t], h_r, atol=5e-3, rtol=5e-3)
    assert jnp.allclose(hT[:, :, 0], h_r, atol=5e-3, rtol=5e-3)
    assert jnp.allclose(cT[:, :, 0], c_r, atol=5e-3, rtol=5e-3)

    print("KERNEL_OK")
</pallas_src>

<mosaic_0001>
module attributes {stable_mosaic.version = 11 : i64} {
  func.func @_convlstm_step_kernel(%arg0: memref<2x220xf32, #tpu.memory_space<vmem>>, %arg1: memref<2x64xf32, #tpu.memory_space<vmem>>, %arg2: memref<2x64xf32, #tpu.memory_space<vmem>>, %arg3: memref<220x256xbf16, #tpu.memory_space<vmem>>, %arg4: memref<64x256xbf16, #tpu.memory_space<vmem>>, %arg5: memref<1x256xf32, #tpu.memory_space<vmem>>, %arg6: memref<2x128xf32, #tpu.memory_space<vmem>>) attributes {dimension_semantics = [], scalar_prefetch = 0 : i64, scratch_operands = 0 : i64, tpu.core_type = #tpu.core_type<tc>} {
    %c0 = arith.constant 0 : index
    %c0_0 = arith.constant 0 : index
    %0 = vector.load %arg0[%c0, %c0_0] : memref<2x220xf32, #tpu.memory_space<vmem>>, vector<2x220xf32>
    %1 = arith.truncf %0 : vector<2x220xf32> to vector<2x220xbf16>
    %c0_1 = arith.constant 0 : index
    %c0_2 = arith.constant 0 : index
    %2 = vector.load %arg3[%c0_1, %c0_2] : memref<220x256xbf16, #tpu.memory_space<vmem>>, vector<220x256xbf16>
    %cst = arith.constant dense<0.000000e+00> : vector<2x256xf32>
    %3 = tpu.matmul %1, %2, %cst {dimension_numbers = #tpu.dot_dimension_numbers<[1], [0], [0], [1], [0, 0, 1, 1], [], []>} : vector<2x220xbf16>, vector<220x256xbf16>, vector<2x256xf32> -> vector<2x256xf32>
    %c0_3 = arith.constant 0 : index
    %c0_4 = arith.constant 0 : index
    %4 = vector.load %arg1[%c0_3, %c0_4] : memref<2x64xf32, #tpu.memory_space<vmem>>, vector<2x64xf32>
    %5 = arith.truncf %4 : vector<2x64xf32> to vector<2x64xbf16>
    %c0_5 = arith.constant 0 : index
    %c0_6 = arith.constant 0 : index
    %6 = vector.load %arg4[%c0_5, %c0_6] : memref<64x256xbf16, #tpu.memory_space<vmem>>, vector<64x256xbf16>
    %cst_7 = arith.constant dense<0.000000e+00> : vector<2x256xf32>
    %7 = tpu.matmul %5, %6, %cst_7 {dimension_numbers = #tpu.dot_dimension_numbers<[1], [0], [0], [1], [0, 0, 1, 1], [], []>} : vector<2x64xbf16>, vector<64x256xbf16>, vector<2x256xf32> -> vector<2x256xf32>
    %8 = arith.addf %3, %7 : vector<2x256xf32>
    %c0_8 = arith.constant 0 : index
    %c0_9 = arith.constant 0 : index
    %9 = vector.load %arg5[%c0_8, %c0_9] : memref<1x256xf32, #tpu.memory_space<vmem>>, vector<1x256xf32>
    %10 = vector.broadcast %9 : vector<1x256xf32> to vector<2x256xf32>
    %11 = arith.addf %8, %10 : vector<2x256xf32>
    %c0_10 = arith.constant 0 : index
    %c0_11 = arith.constant 0 : index
    %12 = vector.load %arg2[%c0_10, %c0_11] : memref<2x64xf32, #tpu.memory_space<vmem>>, vector<2x64xf32>
    %13 = vector.extract_strided_slice %11 {offsets = [0, 0], sizes = [2, 192], strides = [1, 1]} : vector<2x256xf32> to vector<2x192xf32>
    %14 = arith.negf %13 : vector<2x192xf32>
    %15 = math.exp %14 : vector<2x192xf32>
    %cst_12 = arith.constant 1.000000e+00 : f32
    %16 = vector.broadcast %cst_12 : f32 to vector<2x192xf32>
    %17 = arith.addf %16, %15 : vector<2x192xf32>
    %18 = arith.divf %16, %17 : vector<2x192xf32>
    %19 = vector.extract_strided_slice %11 {offsets = [0, 192], sizes = [2, 64], strides = [1, 1]} : vector<2x256xf32> to vector<2x64xf32>
    %20 = math.tanh %19 : vector<2x64xf32>
    %21 = vector.extract_strided_slice %18 {offsets = [0, 64], sizes = [2, 64], strides = [1, 1]} : vector<2x192xf32> to vector<2x64xf32>
    %22 = arith.mulf %21, %12 : vector<2x64xf32>
    %23 = vector.extract_strided_slice %18 {offsets = [0, 0], sizes = [2, 64], strides = [1, 1]} : vector<2x192xf32> to vector<2x64xf32>
    %24 = arith.mulf %23, %20 : vector<2x64xf32>
    %25 = arith.addf %22, %24 : vector<2x64xf32>
    %26 = vector.extract_strided_slice %18 {offsets = [0, 128], sizes = [2, 64], strides = [1, 1]} : vector<2x192xf32> to vector<2x64xf32>
    %27 = math.tanh %25 : vector<2x64xf32>
    %28 = arith.mulf %26, %27 : vector<2x64xf32>
    %29 = tpu.concatenate %28, %25 in 1 : vector<2x64xf32>, vector<2x64xf32> -> vector<2x128xf32>
    %c0_13 = arith.constant 0 : index
    %c0_14 = arith.constant 0 : index
    %30 = vector.load %arg6[%c0_13, %c0_14] : memref<2x128xf32, #tpu.memory_space<vmem>>, vector<2x128xf32>
    tpu.vector_store %arg6[%c0_13, %c0_14], %29 {strides = array<i32>} : memref<2x128xf32, #tpu.memory_space<vmem>>, vector<2x128xf32>,
    return
  }
}

</mosaic_0001>

<llo_original>
// kernel: tpu_custom_call.1
$region0: #{tpu_custom_call.1}
  #allocation0 [shape = 'u32[]', space=smem, size = 0x4, offset = 0x4, fixed_abs, tag = 'smem constant byte address 0x4 - core index']
  #allocation1 [shape = 'u32[72,128]{1,0:T(1,128)}', space=vmem, size = 0x9000, scoped, tag = 'internal scratch']
  %s0 = inlined_call_operand.hbm [shape: f32[2,220], index: 0, kind: input, shape index: {}]
  %s1 = inlined_call_operand.hbm [shape: f32[2,64], index: 1, kind: input, shape index: {}]
  %s2 = inlined_call_operand.hbm [shape: f32[2,64], index: 2, kind: input, shape index: {}]
  %s3 = inlined_call_operand.hbm [shape: bf16[220,256], index: 3, kind: input, shape index: {}]
  %s4 = inlined_call_operand.hbm [shape: bf16[64,256], index: 4, kind: input, shape index: {}]
  %s5 = inlined_call_operand.vmem [shape: f32[1,256], index: 5, kind: input, shape index: {}]
  %s6 = inlined_call_operand.hbm [shape: f32[2,128], index: 6, kind: output, shape index: {}]
  %s7 = sld [smem:[#allocation0]]
  $region54: #{tpu_custom_call.1} parent=0
    _
  %s9 = ssub.s32 1, %s7
  %s10 = scalar_select 0, %s9, %s7
  $region1: #{tpu_custom_call.1} parent=0
    #allocation2 [shape = 'u8[2048]{0}', space=vmem, size = 0x800, scoped, tag = 'input window, operand 0, single buffered']
    #allocation3 [shape = 's32[1]{0}', space=sflag, size = 0x4, scoped, tag = 'scoped memory for tpu_custom_call.1']
    #allocation4 [shape = 's32[1]{0}', space=sflag, size = 0x4, scoped, tag = 'scoped memory for tpu_custom_call.1']
    #allocation5 [shape = 'u8[1024]{0}', space=vmem, size = 0x400, scoped, tag = 'input window, operand 1, single buffered']
    #allocation6 [shape = 's32[1]{0}', space=sflag, size = 0x4, scoped, tag = 'scoped memory for tpu_custom_call.1']
    #allocation7 [shape = 'u8[1024]{0}', space=vmem, size = 0x400, scoped, tag = 'input window, operand 2, single buffered']
    #allocation8 [shape = 'u8[114688]{0}', space=vmem, size = 0x1c000, scoped, tag = 'input window, operand 3, single buffered']
    #allocation9 [shape = 's32[1]{0}', space=sflag, size = 0x4, scoped, tag = 'scoped memory for tpu_custom_call.1']
    #allocation10 [shape = 'u8[32768]{0}', space=vmem, size = 0x8000, scoped, tag = 'input window, operand 4, single buffered']
    #allocation11 [shape = 'u8[1024]{0}', space=vmem, size = 0x400, scoped, tag = 'output window, operand 0, single buffered']
    %11 = vsyncpa [#allocation3], 0
    %12 = vsyncpa [#allocation6], 0
    %13 = vsyncpa [#allocation9], 0
    %14 = vsyncpa [#allocation4], 0
    // Predicated region
    $region2: #{tpu_custom_call.1} parent=1 // pred_check
      _
    $region3: #{tpu_custom_call.1} parent=1 // pred_check_branch
      %16 = sbr.rel (0) target = $region5
    $region4: #{tpu_custom_call.1} parent=1 // pred_region
      %18 = vsyncadd [#allocation3], 0
      %s20 = sshll.u32 %s0, 4
      %s21 = int_to_ptr.hbm [resolvable:$true] %s20
      %s22 = sshll.u32 [#allocation2], 4
      %s23 = int_to_ptr.vmem [resolvable:$true] %s22
      %25 = dma.hbm_to_vmem [thread:$0]  %s21, 64, %s23, [#allocation3]
    $region5: #{tpu_custom_call.1} parent=1 // pred_fallthru
      _
    // Predicated region
    $region6: #{tpu_custom_call.1} parent=1 // pred_check
      _
    $region7: #{tpu_custom_call.1} parent=1 // pred_check_branch
      %27 = sbr.rel (0) target = $region9
    $region8: #{tpu_custom_call.1} parent=1 // pred_region
      %29 = vsyncadd [#allocation6], 0
      %s31 = sshll.u32 %s1, 4
      %s32 = int_to_ptr.hbm [resolvable:$true] %s31
      %s33 = sshll.u32 [#allocation5], 4
      %s34 = int_to_ptr.vmem [resolvable:$true] %s33
      %36 = dma.hbm_to_vmem [thread:$0]  %s32, 32, %s34, [#allocation6]
    $region9: #{tpu_custom_call.1} parent=1 // pred_fallthru
      _
    // Predicated region
    $region10: #{tpu_custom_call.1} parent=1 // pred_check
      _
    $region11: #{tpu_custom_call.1} parent=1 // pred_check_branch
      %38 = sbr.rel (0) target = $region13
    $region12: #{tpu_custom_call.1} parent=1 // pred_region
      %40 = vsyncadd [#allocation6], 0
      %s42 = sshll.u32 %s2, 4
      %s43 = int_to_ptr.hbm [resolvable:$true] %s42
      %s44 = sshll.u32 [#allocation7], 4
      %s45 = int_to_ptr.vmem [resolvable:$true] %s44
      %47 = dma.hbm_to_vmem [thread:$0]  %s43, 32, %s45, [#allocation6]
    $region13: #{tpu_custom_call.1} parent=1 // pred_fallthru
      _
    // Predicated region
    $region14: #{tpu_custom_call.1} parent=1 // pred_check
      _
    $region15: #{tpu_custom_call.1} parent=1 // pred_check_branch
      %49 = sbr.rel (0) target = $region17
    $region16: #{tpu_custom_call.1} parent=1 // pred_region
      %51 = vsyncadd [#allocation9], 0
      %s52 = sshll.u32 %s3, 4
      %s53 = int_to_ptr.hbm [resolvable:$true] %s52
      %s54 = sshll.u32 [#allocation8], 4
      %s55 = int_to_ptr.vmem [resolvable:$true] %s54
      %60 = dma.hbm_to_vmem [thread:$0]  %s53, 3584, %s55, [#allocation9], 128, 128, 8
    $region17: #{tpu_custom_call.1} parent=1 // pred_fallthru
      _
    // Predicated region
    $region18: #{tpu_custom_call.1} parent=1 // pred_check
      _
    $region19: #{tpu_custom_call.1} parent=1 // pred_check_branch
      %62 = sbr.rel (0) target = $region21
    $region20: #{tpu_custom_call.1} parent=1 // pred_region
      %64 = vsyncadd [#allocation9], 0
      %s65 = sshll.u32 %s4, 4
      %s66 = int_to_ptr.hbm [resolvable:$true] %s65
      %s67 = sshll.u32 [#allocation10], 4
      %s68 = int_to_ptr.vmem [resolvable:$true] %s67
      %73 = dma.hbm_to_vmem [thread:$0]  %s66, 1024, %s68, [#allocation9], 128, 128, 8
    $region21: #{tpu_custom_call.1} parent=1 // pred_fallthru
      _
    // Predicated region
    $region22: #{tpu_custom_call.1} parent=1 // pred_check
      _
    $region23: #{tpu_custom_call.1} parent=1 // pred_check_branch
      %75 = sbr.rel (0) target = $region25
    $region24: #{tpu_custom_call.1} parent=1 // pred_region
      _
    $region25: #{tpu_custom_call.1} parent=1 // pred_fallthru
      _
    // Predicated region
    $region26: #{tpu_custom_call.1} parent=1 // pred_check
      _
    $region27: #{tpu_custom_call.1} parent=1 // pred_check_branch
      %77 = sbr.rel (0) target = $region29
    $region28: #{tpu_custom_call.1} parent=1 // pred_region
      %79 = dma.done [#allocation3], 64
    $region29: #{tpu_custom_call.1} parent=1 // pred_fallthru
      _
    // Predicated region
    $region30: #{tpu_custom_call.1} parent=1 // pred_check
      _
    $region31: #{tpu_custom_call.1} parent=1 // pred_check_branch
      %81 = sbr.rel (0) target = $region33
    $region32: #{tpu_custom_call.1} parent=1 // pred_region
      %83 = dma.done [#allocation6], 32
    $region33: #{tpu_custom_call.1} parent=1 // pred_fallthru
      _
    // Predicated region
    $region34: #{tpu_custom_call.1} parent=1 // pred_check
      _
    $region35: #{tpu_custom_call.1} parent=1 // pred_check_branch
      %85 = sbr.rel (0) target = $region37
    $region36: #{tpu_custom_call.1} parent=1 // pred_region
      %87 = dma.done [#allocation6], 32
    $region37: #{tpu_custom_call.1} parent=1 // pred_fallthru
      _
    // Predicated region
    $region38: #{tpu_custom_call.1} parent=1 // pred_check
      _
    $region39: #{tpu_custom_call.1} parent=1 // pred_check_branch
      %89 = sbr.rel (0) target = $region41
    $region40: #{tpu_custom_call.1} parent=1 // pred_region
      %91 = dma.done [#allocation9], 3584
    $region41: #{tpu_custom_call.1} parent=1 // pred_fallthru
      _
    // Predicated region
    $region42: #{tpu_custom_call.1} parent=1 // pred_check
      _
    $region43: #{tpu_custom_call.1} parent=1 // pred_check_branch
      %93 = sbr.rel (0) target = $region45
    $region44: #{tpu_custom_call.1} parent=1 // pred_region
      %95 = dma.done [#allocation9], 1024
    $region45: #{tpu_custom_call.1} parent=1 // pred_fallthru
      _
    %v97 = vld [vmem:[#allocation2] sm:$0xf]
    %99 = vst [vmem:[#allocation1] ss:$4 sm:$0xff] %v97
    %v100 = vld.sshfl [vmem:[#allocation1] sm:$0xff pattern:$0x73625140]
    %v101 = vld.sshfl [vmem:[#allocation1 + $0x8] sm:$0xff pattern:$0x73625140]
    %v104 = vpack.c.bf16 %v100, %v100
    %v105 = vpack.c.bf16 %v101, %v101
    %v106 = vld [vmem:[#allocation8] sm:$0xff]
    %v107 = vld [vmem:[#allocation8 + $0x8] sm:$0xff]
    %v108 = vld [vmem:[#allocation8 + $0x10] sm:$0xff]
    %v109 = vld [vmem:[#allocation8 + $0x18] sm:$0xff]
    %v110 = vld [vmem:[#allocation8 + $0x20] sm:$0xff]
    %v111 = vld [vmem:[#allocation8 + $0x28] sm:$0xff]
    %v112 = vld [vmem:[#allocation8 + $0x30] sm:$0xff]
    %v113 = vld [vmem:[#allocation8 + $0x38] sm:$0xff]
    %v114 = vld [vmem:[#allocation8 + $0x40] sm:$0xff]
    %v115 = vld [vmem:[#allocation8 + $0x48] sm:$0xff]
    %v116 = vld [vmem:[#allocation8 + $0x50] sm:$0xff]
    %v117 = vld [vmem:[#allocation8 + $0x58] sm:$0xff]
    %v118 = vld [vmem:[#allocation8 + $0x60] sm:$0xff]
    %v119 = vld [vmem:[#allocation8 + $0x68] sm:$0xff]
    %v120 = vld [vmem:[#allocation8 + $0x70] sm:$0xff]
    %v121 = vld [vmem:[#allocation8 + $0x78] sm:$0xff]
    %v122 = vld [vmem:[#allocation8 + $0x80] sm:$0xff]
    %v123 = vld [vmem:[#allocation8 + $0x88] sm:$0xff]
    %v124 = vld [vmem:[#allocation8 + $0x90] sm:$0xff]
    %v125 = vld [vmem:[#allocation8 + $0x98] sm:$0xff]
    %v126 = vld [vmem:[#allocation8 + $0xa0] sm:$0xff]
    %v127 = vld [vmem:[#allocation8 + $0xa8] sm:$0xff]
    %v128 = vld [vmem:[#allocation8 + $0xb0] sm:$0xff]
    %v129 = vld [vmem:[#allocation8 + $0xb8] sm:$0xff]
    %v130 = vld [vmem:[#allocation8 + $0xc0] sm:$0xff]
    %v131 = vld [vmem:[#allocation8 + $0xc8] sm:$0xff]
    %v132 = vld [vmem:[#allocation8 + $0xd0] sm:$0xff]
    %v133 = vld [vmem:[#allocation8 + $0xd8] sm:$0x33]
    %v134 = vld [vmem:[#allocation5] sm:$0x3]
    %v135 = vpack.c.bf16 %v134, %v134
    %v136 = vld [vmem:[#allocation10] sm:$0xff]
    %v137 = vld [vmem:[#allocation10 + $0x8] sm:$0xff]
    %v138 = vld [vmem:[#allocation10 + $0x10] sm:$0xff]
    %v139 = vld [vmem:[#allocation10 + $0x18] sm:$0xff]
    %v140 = vld [vmem:[#allocation10 + $0x20] sm:$0xff]
    %v141 = vld [vmem:[#allocation10 + $0x28] sm:$0xff]
    %v142 = vld [vmem:[#allocation10 + $0x30] sm:$0xff]
    %v143 = vld [vmem:[#allocation10 + $0x38] sm:$0xff]
    %v152 = vunpack.c.l.b16 %v136
    %v153 = vunpack.c.h.b16 %v136
    %v154 = vunpack.c.l.b16 %v137
    %v155 = vunpack.c.h.b16 %v137
    %v156 = vunpack.c.l.b16 %v138
    %v157 = vunpack.c.h.b16 %v138
    %v158 = vunpack.c.l.b16 %v139
    %v159 = vunpack.c.h.b16 %v139
    %v160 = vunpack.c.l.b16 %v140
    %v161 = vunpack.c.h.b16 %v140
    %v162 = vunpack.c.l.b16 %v141
    %v163 = vunpack.c.h.b16 %v141
    %v164 = vunpack.c.l.b16 %v142
    %v165 = vunpack.c.h.b16 %v142
    %v166 = vunpack.c.l.b16 %v143
    %v167 = vunpack.c.h.b16 %v143
    %v168 = vpack.c.b16 %v154, %v152
    %v169 = vpack.c.b16 %v155, %v153
    %v170 = vpack.c.b16 %v158, %v156
    %v171 = vpack.c.b16 %v159, %v157
    %v172 = vpack.c.b16 %v162, %v160
    %v173 = vpack.c.b16 %v163, %v161
    %v174 = vpack.c.b16 %v166, %v164
    %v175 = vpack.c.b16 %v167, %v165
    %vm184 = vcmask 523264
    %v186 = vsel %vm184, %v135, 0
    %188 = vmatpush.bf16.msra.mxu0 0
    %189 = vmatpush.bf16.msra.mxu0 0
    %190 = vmatpush.bf16.msra.mxu0 0
    %191 = vmatpush.bf16.msra.mxu0 0
    %192 = vmatpush.bf16.msra.mxu0 %v174
    %193 = vmatpush.bf16.msra.mxu0 %v172
    %194 = vmatpush.bf16.msra.mxu0 %v170
    %195 = vmatpush.bf16.msra.mxu0 %v168
    %196 = vmatmul.bf16.gmra.mxu0 %v186
    %v197 = vpop.f32.mrf.mxu0
    %v198 = vadd.f32 0.0, %v197
    %v199 = vpop.f32.mrf.mxu0
    %200 = vdwg.mxu0
    %201 = vmatpush.bf16.msra.mxu0 0
    %202 = vmatpush.bf16.msra.mxu0 0
    %203 = vmatpush.bf16.msra.mxu0 0
    %204 = vmatpush.bf16.msra.mxu0 0
    %205 = vmatpush.bf16.msra.mxu0 %v175
    %206 = vmatpush.bf16.msra.mxu0 %v173
    %207 = vmatpush.bf16.msra.mxu0 %v171
    %208 = vmatpush.bf16.msra.mxu0 %v169
    %209 = vmatmul.bf16.gmra.mxu0 %v186
    %v210 = vpop.f32.mrf.mxu0
    %v211 = vadd.f32 0.0, %v210
    %v212 = vpop.f32.mrf.mxu0
    %213 = vdwg.mxu0
    %v242 = vunpack.c.l.b16 %v106
    %v243 = vunpack.c.h.b16 %v106
    %v244 = vunpack.c.l.b16 %v107
    %v245 = vunpack.c.h.b16 %v107
    %v246 = vunpack.c.l.b16 %v108
    %v247 = vunpack.c.h.b16 %v108
    %v248 = vunpack.c.l.b16 %v109
    %v249 = vunpack.c.h.b16 %v109
    %v250 = vunpack.c.l.b16 %v110
    %v251 = vunpack.c.h.b16 %v110
    %v252 = vunpack.c.l.b16 %v111
    %v253 = vunpack.c.h.b16 %v111
    %v254 = vunpack.c.l.b16 %v112
    %v255 = vunpack.c.h.b16 %v112
    %v256 = vunpack.c.l.b16 %v113
    %v257 = vunpack.c.h.b16 %v113
    %v258 = vunpack.c.l.b16 %v114
    %v259 = vunpack.c.h.b16 %v114
    %v260 = vunpack.c.l.b16 %v115
    %v261 = vunpack.c.h.b16 %v115
    %v262 = vunpack.c.l.b16 %v116
    %v263 = vunpack.c.h.b16 %v116
    %v264 = vunpack.c.l.b16 %v117
    %v265 = vunpack.c.h.b16 %v117
    %v266 = vunpack.c.l.b16 %v118
    %v267 = vunpack.c.h.b16 %v118
    %v268 = vunpack.c.l.b16 %v119
    %v269 = vunpack.c.h.b16 %v119
    %v270 = vunpack.c.l.b16 %v120
    %v271 = vunpack.c.h.b16 %v120
    %v272 = vunpack.c.l.b16 %v121
    %v273 = vunpack.c.h.b16 %v121
    %v274 = vunpack.c.l.b16 %v122
    %v275 = vunpack.c.h.b16 %v122
    %v276 = vunpack.c.l.b16 %v123
    %v277 = vunpack.c.h.b16 %v123
    %v278 = vunpack.c.l.b16 %v124
    %v279 = vunpack.c.h.b16 %v124
    %v280 = vunpack.c.l.b16 %v125
    %v281 = vunpack.c.h.b16 %v125
    %v282 = vunpack.c.l.b16 %v126
    %v283 = vunpack.c.h.b16 %v126
    %v284 = vunpack.c.l.b16 %v127
    %v285 = vunpack.c.h.b16 %v127
    %v286 = vunpack.c.l.b16 %v128
    %v287 = vunpack.c.h.b16 %v128
    %v288 = vunpack.c.l.b16 %v129
    %v289 = vunpack.c.h.b16 %v129
    %v290 = vunpack.c.l.b16 %v130
    %v291 = vunpack.c.h.b16 %v130
    %v292 = vunpack.c.l.b16 %v131
    %v293 = vunpack.c.h.b16 %v131
    %v294 = vunpack.c.l.b16 %v132
    %v295 = vunpack.c.h.b16 %v132
    %v296 = vunpack.c.l.b16 %v133
    %v297 = vunpack.c.h.b16 %v133
    %v298 = vpack.c.b16 %v244, %v242
    %v299 = vpack.c.b16 %v245, %v243
    %v300 = vpack.c.b16 %v248, %v246
    %v301 = vpack.c.b16 %v249, %v247
    %v302 = vpack.c.b16 %v252, %v250
    %v303 = vpack.c.b16 %v253, %v251
    %v304 = vpack.c.b16 %v256, %v254
    %v305 = vpack.c.b16 %v257, %v255
    %v306 = vpack.c.b16 %v260, %v258
    %v307 = vpack.c.b16 %v261, %v259
    %v308 = vpack.c.b16 %v264, %v262
    %v309 = vpack.c.b16 %v265, %v263
    %v310 = vpack.c.b16 %v268, %v266
    %v311 = vpack.c.b16 %v269, %v267
    %v312 = vpack.c.b16 %v272, %v270
    %v313 = vpack.c.b16 %v273, %v271
    %v314 = vpack.c.b16 %v276, %v274
    %v315 = vpack.c.b16 %v277, %v275
    %v316 = vpack.c.b16 %v280, %v278
    %v317 = vpack.c.b16 %v281, %v279
    %v318 = vpack.c.b16 %v284, %v282
    %v319 = vpack.c.b16 %v285, %v283
    %v320 = vpack.c.b16 %v288, %v286
    %v321 = vpack.c.b16 %v289, %v287
    %v322 = vpack.c.b16 %v292, %v290
    %v323 = vpack.c.b16 %v293, %v291
    %v324 = vpack.c.b16 %v296, %v294
    %v325 = vpack.c.b16 %v297, %v295
    %vm352 = vcmask 752640
    %v354 = vsel %vm352, %v105, 0
    %vm356 = vcmask 1045504
    %v358 = vsel %vm356, %v324, 0
    %v361 = vsel %vm356, %v325, 0
    %363 = vmatpush.bf16.msra.mxu0 %v312
    %364 = vmatpush.bf16.msra.mxu0 %v310
    %365 = vmatpush.bf16.msra.mxu0 %v308
    %366 = vmatpush.bf16.msra.mxu0 %v306
    %367 = vmatpush.bf16.msra.mxu0 %v304
    %368 = vmatpush.bf16.msra.mxu0 %v302
    %369 = vmatpush.bf16.msra.mxu0 %v300
    %370 = vmatpush.bf16.msra.mxu0 %v298
    %371 = vmatmul.bf16.gmra.mxu0 %v104
    %v372 = vpop.f32.mrf.mxu0
    %v373 = vadd.f32 %v198, %v372
    %v374 = vpop.f32.mrf.mxu0
    %375 = vdwg.mxu0
    %376 = vmatpush.bf16.msra.mxu0 0
    %377 = vmatpush.bf16.msra.mxu0 0
    %378 = vmatpush.bf16.msra.mxu0 %v358
    %379 = vmatpush.bf16.msra.mxu0 %v322
    %380 = vmatpush.bf16.msra.mxu0 %v320
    %381 = vmatpush.bf16.msra.mxu0 %v318
    %382 = vmatpush.bf16.msra.mxu0 %v316
    %383 = vmatpush.bf16.msra.mxu0 %v314
    %384 = vmatmul.bf16.gmra.mxu0 %v354
    %v385 = vpop.f32.mrf.mxu0
    %v386 = vadd.f32 %v373, %v385
    %v387 = vpop.f32.mrf.mxu0
    %388 = vdwg.mxu0
    %389 = vmatpush.bf16.msra.mxu0 %v313
    %390 = vmatpush.bf16.msra.mxu0 %v311
    %391 = vmatpush.bf16.msra.mxu0 %v309
    %392 = vmatpush.bf16.msra.mxu0 %v307
    %393 = vmatpush.bf16.msra.mxu0 %v305
    %394 = vmatpush.bf16.msra.mxu0 %v303
    %395 = vmatpush.bf16.msra.mxu0 %v301
    %396 = vmatpush.bf16.msra.mxu0 %v299
    %397 = vmatmul.bf16.gmra.mxu0 %v104
    %v398 = vpop.f32.mrf.mxu0
    %v399 = vadd.f32 %v211, %v398
    %v400 = vpop.f32.mrf.mxu0
    %401 = vdwg.mxu0
    %402 = vmatpush.bf16.msra.mxu0 0
    %403 = vmatpush.bf16.msra.mxu0 0
    %404 = vmatpush.bf16.msra.mxu0 %v361
    %405 = vmatpush.bf16.msra.mxu0 %v323
    %406 = vmatpush.bf16.msra.mxu0 %v321
    %407 = vmatpush.bf16.msra.mxu0 %v319
    %408 = vmatpush.bf16.msra.mxu0 %v317
    %409 = vmatpush.bf16.msra.mxu0 %v315
    %410 = vmatmul.bf16.gmra.mxu0 %v354
    %v411 = vpop.f32.mrf.mxu0
    %v412 = vadd.f32 %v399, %v411
    %v413 = vpop.f32.mrf.mxu0
    %414 = vdwg.mxu0
    %v415 = vld [vmem:[%s5] sm:$0x3]
    %v417 = vperm.slane %v415, 0
    %v418 = vperm.slane %v415, 1
    %v421 = vadd.f32 %v386, %v417
    %v422 = vadd.f32 %v412, %v418
    %v423 = vld [vmem:[#allocation7] sm:$0x3]
    %v424 = vxor.u32 %v421, 2147483648
    %v425 = vxor.u32 %v422, 2147483648
    %v426 = vmul.f32 %v424, 1.442695
    %v427 = vpow.pop %v426
    %v428 = vmul.f32 %v425, 1.442695
    %v429 = vpow.pop %v428
    %v430 = vadd.f32 %v427, 1.0
    %v431 = vadd.f32 %v429, 1.0
    %v432 = vrcp.pop %v430
    %v433 = vmul.f32 %v430, %v432
    %v434 = vsub.f32 1.0, %v433
    %v435 = vmul.f32 %v432, %v434
    %v436 = vadd.f32 %v432, %v435
    %vm437 = vweird.f32 %v430
    %vm438 = vweird.f32 %v432
    %vm439 = vmor %vm437, %vm438
    %v440 = vsel %vm439, %v432, %v436
    %v441 = vand.u32 2147483647, %v430
    %vm442 = vcmp.eq.f32.partialorder %v441, 8.507059e+37
    %v443 = vand.u32 %v430, 2147483648
    %v444 = vor.u32 1.1754944e-38, %v443
    %v445 = vsel %vm442, %v444, %v440
    %v446 = vmul.f32 1.0, %v445
    %v447 = vrcp.pop %v431
    %v448 = vmul.f32 %v431, %v447
    %v449 = vsub.f32 1.0, %v448
    %v450 = vmul.f32 %v447, %v449
    %v451 = vadd.f32 %v447, %v450
    %vm452 = vweird.f32 %v431
    %vm453 = vweird.f32 %v447
    %vm454 = vmor %vm452, %vm453
    %v455 = vsel %vm454, %v447, %v451
    %v456 = vand.u32 2147483647, %v431
    %vm457 = vcmp.eq.f32.partialorder %v456, 8.507059e+37
    %v458 = vand.u32 %v431, 2147483648
    %v459 = vor.u32 1.1754944e-38, %v458
    %v460 = vsel %vm457, %v459, %v455
    %v461 = vmul.f32 1.0, %v460
    %v462 = vtanh.pop %v422
    %464 = vrot.lane.b32.xlu0 %v423, 64
    %v465 = vpop.permute.xlu0 %464
    %v467 = vmul.f32 %v446, %v465
    %469 = vrot.lane.b32.xlu0 %v462, 64
    %v470 = vpop.permute.xlu0 %469
    %v472 = vmul.f32 %v446, %v470
    %474 = vrot.lane.b32.xlu0 %v472, 64
    %v475 = vpop.permute.xlu0 %474
    %v477 = vadd.f32 %v467, %v475
    %v478 = vtanh.pop %v477
    %480 = vrot.lane.b32.xlu0 %v478, 64
    %v481 = vpop.permute.xlu0 %480
    %v483 = vmul.f32 %v461, %v481
    %v484 = vsel %vm184, %v483, %v477
    %485 = vst [vmem:[#allocation11] sm:$0x3] %v484
    // Predicated region
    $region46: #{tpu_custom_call.1} parent=1 // pred_check
      _
    $region47: #{tpu_custom_call.1} parent=1 // pred_check_branch
      %487 = sbr.rel (0) target = $region49
    $region48: #{tpu_custom_call.1} parent=1 // pred_region
      %489 = vsyncadd [#allocation4], 0
      %s491 = sshll.u32 [#allocation11], 4
      %s492 = int_to_ptr.vmem [resolvable:$true] %s491
      %s493 = sshll.u32 %s6, 4
      %s494 = int_to_ptr.hbm [resolvable:$true] %s493
      %496 = dma.vmem_to_hbm [thread:$0]  %s492, 32, %s494, [#allocation4]
    $region49: #{tpu_custom_call.1} parent=1 // pred_fallthru
      _
    // Predicated region
    $region50: #{tpu_custom_call.1} parent=1 // pred_check
      _
    $region51: #{tpu_custom_call.1} parent=1 // pred_check_branch
      %498 = sbr.rel (0) target = $region53
    $region52: #{tpu_custom_call.1} parent=1 // pred_region
      %500 = dma.done [#allocation4], 32
    $region53: #{tpu_custom_call.1} parent=1 // pred_fallthru
      _
    %501 = vsyncpa [#allocation3], 1
    %502 = vsyncpa [#allocation6], 1
    %503 = vsyncpa [#allocation9], 1
    %504 = vsyncpa [#allocation4], 1

</llo_original>
